<compile_context>
chip_gen: v7x
topology: tpu7x:2x2x1
jax: 0.10.0
libtpu: 0.0.40
codegen_flags: <defaults>
</compile_context>

<pallas_src>
import numpy as np
import jax
import jax.numpy as jnp
from jax.experimental import pallas as pl
from jax.experimental.pallas import tpu as pltpu


# ---------------------------------------------------------------------------
# Pallas kernel: fused 4-layer MLP (reg path + basis-folded seasonal path)
# ---------------------------------------------------------------------------
def _encoder_kernel(x_ref, w1_ref, b1_ref, w2_ref, b2_ref, w3_ref, b3_ref,
                    w4_ref, b4_ref, o_ref):
    f32 = jnp.float32

    # x arrives f32 straight from HBM (no wrapper pad/cast pass); cast here.
    h = jnp.dot(x_ref[...].astype(w1_ref.dtype), w1_ref[...],
                preferred_element_type=f32) + b1_ref[...]
    h = jnp.maximum(h, 0.0)
    h = jnp.dot(h.astype(w2_ref.dtype), w2_ref[...],
                preferred_element_type=f32) + b2_ref[...]
    h = jnp.maximum(h, 0.0)
    h = jnp.dot(h.astype(w3_ref.dtype), w3_ref[...],
                preferred_element_type=f32) + b3_ref[...]
    h = jnp.maximum(h, 0.0)
    out = jnp.dot(h.astype(w4_ref.dtype), w4_ref[...],
                  preferred_element_type=f32) + b4_ref[...]

    o_ref[...] = out.astype(o_ref.dtype)


# ---------------------------------------------------------------------------
# Glue: basis construction, param init, MLP fusion + padding, pallas_call
# ---------------------------------------------------------------------------
def _round_up(x, m):
    return ((x + m - 1) // m) * m


def _pad2(a, rows, cols):
    return jnp.pad(a, ((0, rows - a.shape[0]), (0, cols - a.shape[1])))


def make_basis_matrix(L, M, k, poly, denom):
    """Dense B (L*M, M*(2k+poly)) s.t. x_flat @ B == h1_proj (torch ordering)."""
    t = jnp.arange(L, dtype=jnp.float32)
    ang = t[:, None] / denom / L * 2.0 * jnp.pi
    cosb = jnp.cos(ang * jnp.arange(0, k, dtype=jnp.float32)[None, :])            # (L, k)
    sinb = jnp.sin(ang * jnp.arange(1, k + 1, dtype=jnp.float32)[None, :])        # (L, k)
    polyb = (t[:, None] / L) ** jnp.arange(1, poly + 1, dtype=jnp.float32)[None, :]  # (L, poly)

    eye_m = jnp.eye(M, dtype=jnp.float32)

    def expand(basis):  # (L, J) -> (L*M, J*M): row = l*M+m, col = j*M+m
        J = basis.shape[1]
        return jnp.einsum("lj,ab->lajb", basis, eye_m).reshape(L * M, J * M)

    return jnp.concatenate([expand(cosb), expand(sinb), expand(polyb)], axis=1)


def init_linear(key, in_dim, out_dim):
    """PyTorch-Linear-style uniform init; weight stored transposed (in, out)."""
    kw, kb = jax.random.split(key)
    bound = 1.0 / np.sqrt(in_dim)
    W = jax.random.uniform(kw, (in_dim, out_dim), jnp.float32, -bound, bound)
    b = jax.random.uniform(kb, (1, out_dim), jnp.float32, -bound, bound)
    return W, b


def build_fused_params(basis, reg_params, ser_params, aux_dim, d,
                       compute_dtype=jnp.bfloat16, first_layer_dtype=None):
    """Fold basis into the seasonal MLP and fuse both MLPs into one padded MLP.

    first_layer_dtype: set to jnp.float32 if the bf16 quantization of the
    basis-folded w1 hurts accuracy at production L / poly (see review note).
    """
    (rw1, rb1), (rw2, rb2), (rw3, rb3), (rw4, rb4) = reg_params
    (sw1, sb1), (sw2, sb2), (sw3, sb3), (sw4, sb4) = ser_params
    H = 2 * aux_dim

    sw1_folded = basis @ sw1                                       # (LM, aux)
    w1 = jnp.concatenate([rw1, sw1_folded], axis=1)                # (LM, 2*aux)
    b1 = jnp.concatenate([rb1, sb1], axis=1)                       # (1, 2*aux)

    # TODO(synk): if aux_dim grows so H_pad >= 512, replace the zero-filled
    # block-diagonal w2/w3 with two half-width dots (v5e compute-bound case).
    zero = jnp.zeros((aux_dim, aux_dim), jnp.float32)
    w2 = jnp.block([[rw2, zero], [zero, sw2]])                     # (2*aux, 2*aux)
    b2 = jnp.concatenate([rb2, sb2], axis=1)
    w3 = jnp.block([[rw3, zero], [zero, sw3]])
    b3 = jnp.concatenate([rb3, sb3], axis=1)

    w4 = jnp.concatenate([rw4, sw4], axis=0)                       # (2*aux, d)
    b4 = rb4 + sb4                                                 # (1, d)

    H_pad = _round_up(H, 128)
    D_pad = _round_up(d, 128)
    fdt = compute_dtype if first_layer_dtype is None else first_layer_dtype

    # w1 keeps exactly L*M rows: x is passed unpadded (full-extent block).
    w1 = jnp.pad(w1, ((0, 0), (0, H_pad - H))).astype(fdt)
    w2 = _pad2(w2, H_pad, H_pad).astype(compute_dtype)
    w3 = _pad2(w3, H_pad, H_pad).astype(compute_dtype)
    w4 = _pad2(w4, H_pad, D_pad).astype(compute_dtype)
    b1 = _pad2(b1, 1, H_pad)   # biases stay f32 (added post-MXU in f32)
    b2 = _pad2(b2, 1, H_pad)
    b3 = _pad2(b3, 1, H_pad)
    b4 = _pad2(b4, 1, D_pad)

    return (w1, b1, w2, b2, w3, b3, w4, b4), (w1.shape[0], H_pad, D_pad)


def seasonal_trend_encoder(x, fused_params, d, *,
                           block_rows=1024,
                           out_dtype=jnp.float32,
                           vmem_budget_bytes=36 * 1024 * 1024,
                           return_padded=False):
    """x: (N, L, M) float32 -> z: (N, d) in out_dtype.

    vmem_budget_bytes defaults to a v7x-safe value (64 MiB physical VMEM);
    raise it (e.g. 64-96 MiB) on v5e/v6e to enable larger batch tiles.
    """
    w1, b1, w2, b2, w3, b3, w4, b4 = fused_params
    LM, H_pad = w1.shape
    D_pad = w4.shape[1]

    N = x.shape[0]
    x_flat = x.reshape(N, -1)
    assert x_flat.shape[1] == LM, "x feature size must equal L*M"

    out_itemsize = np.dtype(out_dtype).itemsize
    weights = (w1, b1, w2, b2, w3, b3, w4, b4)
    w_bytes = sum(int(a.size) * a.dtype.itemsize for a in weights)

    def step_vmem(tn):
        x_buf = 2 * tn * LM * 4                     # f32 x tile, double-buffered
        o_buf = 2 * tn * D_pad * out_itemsize       # output tile, double-buffered
        inter = 2 * tn * H_pad * 4 + tn * max(LM, H_pad) * 2  # f32 h + bf16 casts
        return w_bytes + x_buf + o_buf + inter

    # Balanced batch tiling: minimize last-tile zero padding, keep >=2 grid
    # steps for large N (v7x megacore), fit the VMEM budget.
    n_tiles = max(1, pl.cdiv(N, block_rows))
    if N >= 512:
        n_tiles = max(n_tiles, 2)
    TN = _round_up(pl.cdiv(N, n_tiles), 16)
    while step_vmem(TN) > vmem_budget_bytes and TN > 16:
        n_tiles += 1
        TN = _round_up(pl.cdiv(N, n_tiles), 16)
    n_tiles = pl.cdiv(N, TN)
    N_pad = n_tiles * TN
    grid = (n_tiles,)

    # Only ragged batch tails get padded (rows only, stays f32). No column
    # padding and no dtype cast in the wrapper.
    if N_pad > N:
        x_flat = jnp.pad(x_flat, ((0, N_pad - N), (0, 0)))

    flops = 2 * N_pad * (LM * H_pad + 2 * H_pad * H_pad + H_pad * D_pad)
    bytes_accessed = N_pad * LM * 4 + N_pad * D_pad * out_itemsize + w_bytes
    cost = pl.CostEstimate(flops=int(flops), transcendentals=0,
                           bytes_accessed=int(bytes_accessed))

    vmem_limit = int(min(step_vmem(TN) + 12 * 1024 * 1024, 48 * 1024 * 1024))

    def _run(single_buffer_weights):
        def w_spec(shape):
            idx = lambda i: (0,) * len(shape)
            if single_buffer_weights:
                # Constant index map -> one resident buffer is enough.
                return pl.BlockSpec(shape, idx, pipeline_mode=pl.Buffered(1))
            return pl.BlockSpec(shape, idx)

        in_specs = [
            pl.BlockSpec((TN, LM), lambda i: (i, 0)),   # x tile (pipelined, f32)
            w_spec(w1.shape), w_spec(b1.shape),
            w_spec(w2.shape), w_spec(b2.shape),
            w_spec(w3.shape), w_spec(b3.shape),
            w_spec(w4.shape), w_spec(b4.shape),
        ]
        out_specs = pl.BlockSpec((TN, D_pad), lambda i: (i, 0))

        return pl.pallas_call(
            _encoder_kernel,
            out_shape=jax.ShapeDtypeStruct((N_pad, D_pad), out_dtype),
            grid=grid,
            in_specs=in_specs,
            out_specs=out_specs,
            compiler_params=pltpu.CompilerParams(
                dimension_semantics=("parallel",),
                vmem_limit_bytes=vmem_limit,
            ),
            cost_estimate=cost,
        )(x_flat, *weights)

    try:
        out = _run(True)
    except Exception:
        # Fallback if this JAX build rejects pipeline_mode=pl.Buffered(1).
        out = _run(False)

    if return_padded:
        return out                 # (N_pad, D_pad); valid region is [:N, :d]
    return out[:N, :d]


# ---------------------------------------------------------------------------
# Pure-JAX reference (mirrors the torch forward exactly, f32) for verification
# ---------------------------------------------------------------------------
def reference_forward(x, L, M, k, poly, denom, reg_params, ser_params):
    N = x.shape[0]
    t = jnp.arange(L, dtype=jnp.float32)
    ang = t[:, None] / denom / L * 2.0 * jnp.pi
    cosb = jnp.cos(ang * jnp.arange(0, k, dtype=jnp.float32)[None, :])
    sinb = jnp.sin(ang * jnp.arange(1, k + 1, dtype=jnp.float32)[None, :])
    polyb = (t[:, None] / L) ** jnp.arange(1, poly + 1, dtype=jnp.float32)[None, :]

    h1 = x.reshape(N, L, 1, M)

    def l2(basis):  # sum over L, flatten (J, M) -> index j*M + m
        return jnp.sum(basis[None, :, :, None] * h1, axis=1).reshape(N, -1)

    h1_proj = jnp.concatenate([l2(cosb), l2(sinb), l2(polyb)], axis=1)

    def mlp(inp, params):
        (w1, b1), (w2, b2), (w3, b3), (w4, b4) = params
        h = jnp.maximum(inp @ w1 + b1, 0.0)
        h = jnp.maximum(h @ w2 + b2, 0.0)
        h = jnp.maximum(h @ w3 + b3, 0.0)
        return h @ w4 + b4

    return mlp(h1_proj, ser_params) + mlp(x.reshape(N, -1), reg_params)


# ---------------------------------------------------------------------------
if __name__ == "__main__":
    # Small config consistent with the module (int_dim is unused in forward).
    N, L, M = 2, 8, 4
    aux_dim, int_dim, d, k, poly, denom = 32, 16, 16, 3, 2, 1

    key = jax.random.PRNGKey(0)
    kx, k1, k2, k3, k4, k5, k6, k7, k8 = jax.random.split(key, 9)

    x = jax.random.normal(kx, (N, L, M), dtype=jnp.float32)

    LM = L * M
    P = M * (2 * k + poly)

    # reg1: Linear(L*M, aux) -> aux -> aux -> d
    reg_params = [
        init_linear(k1, LM, aux_dim),
        init_linear(k2, aux_dim, aux_dim),
        init_linear(k3, aux_dim, aux_dim),
        init_linear(k4, aux_dim, d),
    ]
    # series_coder: Linear(P, aux) -> aux -> aux -> d
    ser_params = [
        init_linear(k5, P, aux_dim),
        init_linear(k6, aux_dim, aux_dim),
        init_linear(k7, aux_dim, aux_dim),
        init_linear(k8, aux_dim, d),
    ]

    basis = make_basis_matrix(L, M, k, poly, denom)
    fused_params, _ = build_fused_params(basis, reg_params, ser_params,
                                         aux_dim, d, compute_dtype=jnp.bfloat16)

    z = seasonal_trend_encoder(x, fused_params, d)
    z = jax.block_until_ready(z)

    z_ref = reference_forward(x, L, M, k, poly, denom, reg_params, ser_params)
    # Loose tolerance: bf16 MXU operands + basis-folded / fused association
    # differ slightly from the f32 torch-order reference.
    np.testing.assert_allclose(np.asarray(z), np.asarray(z_ref),
                               rtol=5e-2, atol=5e-2)

    print("KERNEL_OK")
</pallas_src>

<mosaic_0001>
module attributes {stable_mosaic.version = 11 : i64} {
  func.func @_encoder_kernel(%arg0: i32, %arg1: memref<16x32xf32, #tpu.memory_space<vmem>>, %arg2: memref<32x128xbf16, #tpu.memory_space<vmem>>, %arg3: memref<1x128xf32, #tpu.memory_space<vmem>>, %arg4: memref<128x128xbf16, #tpu.memory_space<vmem>>, %arg5: memref<1x128xf32, #tpu.memory_space<vmem>>, %arg6: memref<128x128xbf16, #tpu.memory_space<vmem>>, %arg7: memref<1x128xf32, #tpu.memory_space<vmem>>, %arg8: memref<128x128xbf16, #tpu.memory_space<vmem>>, %arg9: memref<1x128xf32, #tpu.memory_space<vmem>>, %arg10: memref<16x128xf32, #tpu.memory_space<vmem>>) attributes {dimension_semantics = [#tpu.dimension_semantics<parallel>], iteration_bounds = array<i64: 1>, scalar_prefetch = 0 : i64, scratch_operands = 0 : i64, tpu.core_type = #tpu.core_type<tc>, window_params = [{transform_indices = @transform_0, window_bounds = array<i64: 16, 32>}, {pipeline_mode = #tpu.pipeline_mode<synchronous>, transform_indices = @transform_1, window_bounds = array<i64: 32, 128>}, {pipeline_mode = #tpu.pipeline_mode<synchronous>, transform_indices = @transform_2, window_bounds = array<i64: 1, 128>}, {pipeline_mode = #tpu.pipeline_mode<synchronous>, transform_indices = @transform_3, window_bounds = array<i64: 128, 128>}, {pipeline_mode = #tpu.pipeline_mode<synchronous>, transform_indices = @transform_4, window_bounds = array<i64: 1, 128>}, {pipeline_mode = #tpu.pipeline_mode<synchronous>, transform_indices = @transform_5, window_bounds = array<i64: 128, 128>}, {pipeline_mode = #tpu.pipeline_mode<synchronous>, transform_indices = @transform_6, window_bounds = array<i64: 1, 128>}, {pipeline_mode = #tpu.pipeline_mode<synchronous>, transform_indices = @transform_7, window_bounds = array<i64: 128, 128>}, {pipeline_mode = #tpu.pipeline_mode<synchronous>, transform_indices = @transform_8, window_bounds = array<i64: 1, 128>}, {transform_indices = @transform_9, window_bounds = array<i64: 16, 128>}]} {
    %c0 = arith.constant 0 : index
    %c0_0 = arith.constant 0 : index
    %0 = vector.load %arg1[%c0, %c0_0] : memref<16x32xf32, #tpu.memory_space<vmem>>, vector<16x32xf32>
    %1 = arith.truncf %0 : vector<16x32xf32> to vector<16x32xbf16>
    %c0_1 = arith.constant 0 : index
    %c0_2 = arith.constant 0 : index
    %2 = vector.load %arg2[%c0_1, %c0_2] : memref<32x128xbf16, #tpu.memory_space<vmem>>, vector<32x128xbf16>
    %cst = arith.constant dense<0.000000e+00> : vector<16x128xf32>
    %3 = tpu.matmul %1, %2, %cst {dimension_numbers = #tpu.dot_dimension_numbers<[1], [0], [0], [1], [0, 0, 1, 1], [], []>} : vector<16x32xbf16>, vector<32x128xbf16>, vector<16x128xf32> -> vector<16x128xf32>
    %c0_3 = arith.constant 0 : index
    %c0_4 = arith.constant 0 : index
    %4 = vector.load %arg3[%c0_3, %c0_4] : memref<1x128xf32, #tpu.memory_space<vmem>>, vector<1x128xf32>
    %5 = vector.broadcast %4 : vector<1x128xf32> to vector<16x128xf32>
    %6 = arith.addf %3, %5 : vector<16x128xf32>
    %cst_5 = arith.constant 0.000000e+00 : f32
    %7 = vector.broadcast %cst_5 : f32 to vector<16x128xf32>
    %8 = arith.maximumf %6, %7 : vector<16x128xf32>
    %9 = arith.truncf %8 : vector<16x128xf32> to vector<16x128xbf16>
    %c0_6 = arith.constant 0 : index
    %c0_7 = arith.constant 0 : index
    %10 = vector.load %arg4[%c0_6, %c0_7] : memref<128x128xbf16, #tpu.memory_space<vmem>>, vector<128x128xbf16>
    %cst_8 = arith.constant dense<0.000000e+00> : vector<16x128xf32>
    %11 = tpu.matmul %9, %10, %cst_8 {dimension_numbers = #tpu.dot_dimension_numbers<[1], [0], [0], [1], [0, 0, 1, 1], [], []>} : vector<16x128xbf16>, vector<128x128xbf16>, vector<16x128xf32> -> vector<16x128xf32>
    %c0_9 = arith.constant 0 : index
    %c0_10 = arith.constant 0 : index
    %12 = vector.load %arg5[%c0_9, %c0_10] : memref<1x128xf32, #tpu.memory_space<vmem>>, vector<1x128xf32>
    %13 = vector.broadcast %12 : vector<1x128xf32> to vector<16x128xf32>
    %14 = arith.addf %11, %13 : vector<16x128xf32>
    %cst_11 = arith.constant 0.000000e+00 : f32
    %15 = vector.broadcast %cst_11 : f32 to vector<16x128xf32>
    %16 = arith.maximumf %14, %15 : vector<16x128xf32>
    %17 = arith.truncf %16 : vector<16x128xf32> to vector<16x128xbf16>
    %c0_12 = arith.constant 0 : index
    %c0_13 = arith.constant 0 : index
    %18 = vector.load %arg6[%c0_12, %c0_13] : memref<128x128xbf16, #tpu.memory_space<vmem>>, vector<128x128xbf16>
    %cst_14 = arith.constant dense<0.000000e+00> : vector<16x128xf32>
    %19 = tpu.matmul %17, %18, %cst_14 {dimension_numbers = #tpu.dot_dimension_numbers<[1], [0], [0], [1], [0, 0, 1, 1], [], []>} : vector<16x128xbf16>, vector<128x128xbf16>, vector<16x128xf32> -> vector<16x128xf32>
    %c0_15 = arith.constant 0 : index
    %c0_16 = arith.constant 0 : index
    %20 = vector.load %arg7[%c0_15, %c0_16] : memref<1x128xf32, #tpu.memory_space<vmem>>, vector<1x128xf32>
    %21 = vector.broadcast %20 : vector<1x128xf32> to vector<16x128xf32>
    %22 = arith.addf %19, %21 : vector<16x128xf32>
    %cst_17 = arith.constant 0.000000e+00 : f32
    %23 = vector.broadcast %cst_17 : f32 to vector<16x128xf32>
    %24 = arith.maximumf %22, %23 : vector<16x128xf32>
    %25 = arith.truncf %24 : vector<16x128xf32> to vector<16x128xbf16>
    %c0_18 = arith.constant 0 : index
    %c0_19 = arith.constant 0 : index
    %26 = vector.load %arg8[%c0_18, %c0_19] : memref<128x128xbf16, #tpu.memory_space<vmem>>, vector<128x128xbf16>
    %cst_20 = arith.constant dense<0.000000e+00> : vector<16x128xf32>
    %27 = tpu.matmul %25, %26, %cst_20 {dimension_numbers = #tpu.dot_dimension_numbers<[1], [0], [0], [1], [0, 0, 1, 1], [], []>} : vector<16x128xbf16>, vector<128x128xbf16>, vector<16x128xf32> -> vector<16x128xf32>
    %c0_21 = arith.constant 0 : index
    %c0_22 = arith.constant 0 : index
    %28 = vector.load %arg9[%c0_21, %c0_22] : memref<1x128xf32, #tpu.memory_space<vmem>>, vector<1x128xf32>
    %29 = vector.broadcast %28 : vector<1x128xf32> to vector<16x128xf32>
    %30 = arith.addf %27, %29 : vector<16x128xf32>
    %c0_23 = arith.constant 0 : index
    %c0_24 = arith.constant 0 : index
    %31 = vector.load %arg10[%c0_23, %c0_24] : memref<16x128xf32, #tpu.memory_space<vmem>>, vector<16x128xf32>
    tpu.vector_store %arg10[%c0_23, %c0_24], %30 {strides = array<i32>} : memref<16x128xf32, #tpu.memory_space<vmem>>, vector<16x128xf32>,
    return
  }
  func.func @transform_0(%arg0: i32) -> (i32, i32) {
    %c0_i32 = arith.constant 0 : i32
    %c0_i32_0 = arith.constant 0 : i32
    return %arg0, %c0_i32 : i32, i32
  }
  func.func @transform_1(%arg0: i32) -> (i32, i32) {
    %c0_i32 = arith.constant 0 : i32
    %c0_i32_0 = arith.constant 0 : i32
    %c0_i32_1 = arith.constant 0 : i32
    return %c0_i32, %c0_i32_0 : i32, i32
  }
  func.func @transform_2(%arg0: i32) -> (i32, i32) {
    %c0_i32 = arith.constant 0 : i32
    %c0_i32_0 = arith.constant 0 : i32
    %c0_i32_1 = arith.constant 0 : i32
    return %c0_i32, %c0_i32_0 : i32, i32
  }
  func.func @transform_3(%arg0: i32) -> (i32, i32) {
    %c0_i32 = arith.constant 0 : i32
    %c0_i32_0 = arith.constant 0 : i32
    %c0_i32_1 = arith.constant 0 : i32
    return %c0_i32, %c0_i32_0 : i32, i32
  }
  func.func @transform_4(%arg0: i32) -> (i32, i32) {
    %c0_i32 = arith.constant 0 : i32
    %c0_i32_0 = arith.constant 0 : i32
    %c0_i32_1 = arith.constant 0 : i32
    return %c0_i32, %c0_i32_0 : i32, i32
  }
  func.func @transform_5(%arg0: i32) -> (i32, i32) {
    %c0_i32 = arith.constant 0 : i32
    %c0_i32_0 = arith.constant 0 : i32
    %c0_i32_1 = arith.constant 0 : i32
    return %c0_i32, %c0_i32_0 : i32, i32
  }
  func.func @transform_6(%arg0: i32) -> (i32, i32) {
    %c0_i32 = arith.constant 0 : i32
    %c0_i32_0 = arith.constant 0 : i32
    %c0_i32_1 = arith.constant 0 : i32
    return %c0_i32, %c0_i32_0 : i32, i32
  }
  func.func @transform_7(%arg0: i32) -> (i32, i32) {
    %c0_i32 = arith.constant 0 : i32
    %c0_i32_0 = arith.constant 0 : i32
    %c0_i32_1 = arith.constant 0 : i32
    return %c0_i32, %c0_i32_0 : i32, i32
  }
  func.func @transform_8(%arg0: i32) -> (i32, i32) {
    %c0_i32 = arith.constant 0 : i32
    %c0_i32_0 = arith.constant 0 : i32
    %c0_i32_1 = arith.constant 0 : i32
    return %c0_i32, %c0_i32_0 : i32, i32
  }
  func.func @transform_9(%arg0: i32) -> (i32, i32) {
    %c0_i32 = arith.constant 0 : i32
    %c0_i32_0 = arith.constant 0 : i32
    return %arg0, %c0_i32 : i32, i32
  }
}

module attributes {stable_mosaic.version = 11 : i64} {
  func.func @_encoder_kernel(%arg0: i32, %arg1: memref<16x32xf32, #tpu.memory_space<vmem>>, %arg2: memref<32x128xbf16, #tpu.memory_space<vmem>>, %arg3: memref<1x128xf32, #tpu.memory_space<vmem>>, %arg4: memref<128x128xbf16, #tpu.memory_space<vmem>>, %arg5: memref<1x128xf32, #tpu.memory_space<vmem>>, %arg6: memref<128x128xbf16, #tpu.memory_space<vmem>>, %arg7: memref<1x128xf32, #tpu.memory_space<vmem>>, %arg8: memref<128x128xbf16, #tpu.memory_space<vmem>>, %arg9: memref<1x128xf32, #tpu.memory_space<vmem>>, %arg10: memref<16x128xf32, #tpu.memory_space<vmem>>) attributes {dimension_semantics = [#tpu.dimension_semantics<parallel>], iteration_bounds = array<i64: 1>, scalar_prefetch = 0 : i64, scratch_operands = 0 : i64, tpu.core_type = #tpu.core_type<tc>, window_params = [{transform_indices = @transform_0, window_bounds = array<i64: 16, 32>}, {pipeline_mode = #tpu.pipeline_mode<synchronous>, transform_indices = @transform_1, window_bounds = array<i64: 32, 128>}, {pipeline_mode = #tpu.pipeline_mode<synchronous>, transform_indices = @transform_2, window_bounds = array<i64: 1, 128>}, {pipeline_mode = #tpu.pipeline_mode<synchronous>, transform_indices = @transform_3, window_bounds = array<i64: 128, 128>}, {pipeline_mode = #tpu.pipeline_mode<synchronous>, transform_indices = @transform_4, window_bounds = array<i64: 1, 128>}, {pipeline_mode = #tpu.pipeline_mode<synchronous>, transform_indices = @transform_5, window_bounds = array<i64: 128, 128>}, {pipeline_mode = #tpu.pipeline_mode<synchronous>, transform_indices = @transform_6, window_bounds = array<i64: 1, 128>}, {pipeline_mode = #tpu.pipeline_mode<synchronous>, transform_indices = @transform_7, window_bounds = array<i64: 128, 128>}, {pipeline_mode = #tpu.pipeline_mode<synchronous>, transform_indices = @transform_8, window_bounds = array<i64: 1, 128>}, {transform_indices = @transform_9, window_bounds = array<i64: 16, 128>}]} {
    %c0 = arith.constant 0 : index
    %c0_0 = arith.constant 0 : index
    %0 = vector.load %arg1[%c0, %c0_0] : memref<16x32xf32, #tpu.memory_space<vmem>>, vector<16x32xf32>
    %1 = arith.truncf %0 : vector<16x32xf32> to vector<16x32xbf16>
    %c0_1 = arith.constant 0 : index
    %c0_2 = arith.constant 0 : index
    %2 = vector.load %arg2[%c0_1, %c0_2] : memref<32x128xbf16, #tpu.memory_space<vmem>>, vector<32x128xbf16>
    %cst = arith.constant dense<0.000000e+00> : vector<16x128xf32>
    %3 = tpu.matmul %1, %2, %cst {dimension_numbers = #tpu.dot_dimension_numbers<[1], [0], [0], [1], [0, 0, 1, 1], [], []>} : vector<16x32xbf16>, vector<32x128xbf16>, vector<16x128xf32> -> vector<16x128xf32>
    %c0_3 = arith.constant 0 : index
    %c0_4 = arith.constant 0 : index
    %4 = vector.load %arg3[%c0_3, %c0_4] : memref<1x128xf32, #tpu.memory_space<vmem>>, vector<1x128xf32>
    %5 = vector.broadcast %4 : vector<1x128xf32> to vector<16x128xf32>
    %6 = arith.addf %3, %5 : vector<16x128xf32>
    %cst_5 = arith.constant 0.000000e+00 : f32
    %7 = vector.broadcast %cst_5 : f32 to vector<16x128xf32>
    %8 = arith.maximumf %6, %7 : vector<16x128xf32>
    %9 = arith.truncf %8 : vector<16x128xf32> to vector<16x128xbf16>
    %c0_6 = arith.constant 0 : index
    %c0_7 = arith.constant 0 : index
    %10 = vector.load %arg4[%c0_6, %c0_7] : memref<128x128xbf16, #tpu.memory_space<vmem>>, vector<128x128xbf16>
    %cst_8 = arith.constant dense<0.000000e+00> : vector<16x128xf32>
    %11 = tpu.matmul %9, %10, %cst_8 {dimension_numbers = #tpu.dot_dimension_numbers<[1], [0], [0], [1], [0, 0, 1, 1], [], []>} : vector<16x128xbf16>, vector<128x128xbf16>, vector<16x128xf32> -> vector<16x128xf32>
    %c0_9 = arith.constant 0 : index
    %c0_10 = arith.constant 0 : index
    %12 = vector.load %arg5[%c0_9, %c0_10] : memref<1x128xf32, #tpu.memory_space<vmem>>, vector<1x128xf32>
    %13 = vector.broadcast %12 : vector<1x128xf32> to vector<16x128xf32>
    %14 = arith.addf %11, %13 : vector<16x128xf32>
    %cst_11 = arith.constant 0.000000e+00 : f32
    %15 = vector.broadcast %cst_11 : f32 to vector<16x128xf32>
    %16 = arith.maximumf %14, %15 : vector<16x128xf32>
    %17 = arith.truncf %16 : vector<16x128xf32> to vector<16x128xbf16>
    %c0_12 = arith.constant 0 : index
    %c0_13 = arith.constant 0 : index
    %18 = vector.load %arg6[%c0_12, %c0_13] : memref<128x128xbf16, #tpu.memory_space<vmem>>, vector<128x128xbf16>
    %cst_14 = arith.constant dense<0.000000e+00> : vector<16x128xf32>
    %19 = tpu.matmul %17, %18, %cst_14 {dimension_numbers = #tpu.dot_dimension_numbers<[1], [0], [0], [1], [0, 0, 1, 1], [], []>} : vector<16x128xbf16>, vector<128x128xbf16>, vector<16x128xf32> -> vector<16x128xf32>
    %c0_15 = arith.constant 0 : index
    %c0_16 = arith.constant 0 : index
    %20 = vector.load %arg7[%c0_15, %c0_16] : memref<1x128xf32, #tpu.memory_space<vmem>>, vector<1x128xf32>
    %21 = vector.broadcast %20 : vector<1x128xf32> to vector<16x128xf32>
    %22 = arith.addf %19, %21 : vector<16x128xf32>
    %cst_17 = arith.constant 0.000000e+00 : f32
    %23 = vector.broadcast %cst_17 : f32 to vector<16x128xf32>
    %24 = arith.maximumf %22, %23 : vector<16x128xf32>
    %25 = arith.truncf %24 : vector<16x128xf32> to vector<16x128xbf16>
    %c0_18 = arith.constant 0 : index
    %c0_19 = arith.constant 0 : index
    %26 = vector.load %arg8[%c0_18, %c0_19] : memref<128x128xbf16, #tpu.memory_space<vmem>>, vector<128x128xbf16>
    %cst_20 = arith.constant dense<0.000000e+00> : vector<16x128xf32>
    %27 = tpu.matmul %25, %26, %cst_20 {dimension_numbers = #tpu.dot_dimension_numbers<[1], [0], [0], [1], [0, 0, 1, 1], [], []>} : vector<16x128xbf16>, vector<128x128xbf16>, vector<16x128xf32> -> vector<16x128xf32>
    %c0_21 = arith.constant 0 : index
    %c0_22 = arith.constant 0 : index
    %28 = vector.load %arg9[%c0_21, %c0_22] : memref<1x128xf32, #tpu.memory_space<vmem>>, vector<1x128xf32>
    %29 = vector.broadcast %28 : vector<1x128xf32> to vector<16x128xf32>
    %30 = arith.addf %27, %29 : vector<16x128xf32>
    %c0_23 = arith.constant 0 : index
    %c0_24 = arith.constant 0 : index
    %31 = vector.load %arg10[%c0_23, %c0_24] : memref<16x128xf32, #tpu.memory_space<vmem>>, vector<16x128xf32>
    tpu.vector_store %arg10[%c0_23, %c0_24], %30 {strides = array<i32>} : memref<16x128xf32, #tpu.memory_space<vmem>>, vector<16x128xf32>,
    return
  }
  func.func @transform_0(%arg0: i32) -> (i32, i32) {
    %c0_i32 = arith.constant 0 : i32
    %c0_i32_0 = arith.constant 0 : i32
    return %arg0, %c0_i32 : i32, i32
  }
  func.func @transform_1(%arg0: i32) -> (i32, i32) {
    %c0_i32 = arith.constant 0 : i32
    %c0_i32_0 = arith.constant 0 : i32
    %c0_i32_1 = arith.constant 0 : i32
    return %c0_i32, %c0_i32_0 : i32, i32
  }
  func.func @transform_2(%arg0: i32) -> (i32, i32) {
    %c0_i32 = arith.constant 0 : i32
    %c0_i32_0 = arith.constant 0 : i32
    %c0_i32_1 = arith.constant 0 : i32
    return %c0_i32, %c0_i32_0 : i32, i32
  }
  func.func @transform_3(%arg0: i32) -> (i32, i32) {
    %c0_i32 = arith.constant 0 : i32
    %c0_i32_0 = arith.constant 0 : i32
    %c0_i32_1 = arith.constant 0 : i32
    return %c0_i32, %c0_i32_0 : i32, i32
  }
  func.func @transform_4(%arg0: i32) -> (i32, i32) {
    %c0_i32 = arith.constant 0 : i32
    %c0_i32_0 = arith.constant 0 : i32
    %c0_i32_1 = arith.constant 0 : i32
    return %c0_i32, %c0_i32_0 : i32, i32
  }
  func.func @transform_5(%arg0: i32) -> (i32, i32) {
    %c0_i32 = arith.constant 0 : i32
    %c0_i32_0 = arith.constant 0 : i32
    %c0_i32_1 = arith.constant 0 : i32
    return %c0_i32, %c0_i32_0 : i32, i32
  }
  func.func @transform_6(%arg0: i32) -> (i32, i32) {
    %c0_i32 = arith.constant 0 : i32
    %c0_i32_0 = arith.constant 0 : i32
    %c0_i32_1 = arith.constant 0 : i32
    return %c0_i32, %c0_i32_0 : i32, i32
  }
  func.func @transform_7(%arg0: i32) -> (i32, i32) {
    %c0_i32 = arith.constant 0 : i32
    %c0_i32_0 = arith.constant 0 : i32
    %c0_i32_1 = arith.constant 0 : i32
    return %c0_i32, %c0_i32_0 : i32, i32
  }
  func.func @transform_8(%arg0: i32) -> (i32, i32) {
    %c0_i32 = arith.constant 0 : i32
    %c0_i32_0 = arith.constant 0 : i32
    %c0_i32_1 = arith.constant 0 : i32
    return %c0_i32, %c0_i32_0 : i32, i32
  }
  func.func @transform_9(%arg0: i32) -> (i32, i32) {
    %c0_i32 = arith.constant 0 : i32
    %c0_i32_0 = arith.constant 0 : i32
    return %arg0, %c0_i32 : i32, i32
  }
}

</mosaic_0001>

<llo_original>
// kernel: tpu_custom_call.1
$region0: #{tpu_custom_call.1}
  #allocation0 [shape = 'u32[]', space=smem, size = 0x4, offset = 0x4, fixed_abs, tag = 'smem constant byte address 0x4 - core index']
  #allocation1 [shape = 'u32[144,128]{1,0:T(1,128)}', space=vmem, size = 0x12000, scoped, tag = 'internal scratch']
  %s0 = inlined_call_operand.hbm [shape: f32[16,32], index: 0, kind: input, shape index: {}]
  %s1 = inlined_call_operand.hbm [shape: bf16[32,128], index: 1, kind: input, shape index: {}]
  %s2 = inlined_call_operand.vmem [shape: f32[1,128], index: 2, kind: input, shape index: {}]
  %s3 = inlined_call_operand.hbm [shape: bf16[128,128], index: 3, kind: input, shape index: {}]
  %s4 = inlined_call_operand.vmem [shape: f32[1,128], index: 4, kind: input, shape index: {}]
  %s5 = inlined_call_operand.hbm [shape: bf16[128,128], index: 5, kind: input, shape index: {}]
  %s6 = inlined_call_operand.vmem [shape: f32[1,128], index: 6, kind: input, shape index: {}]
  %s7 = inlined_call_operand.hbm [shape: bf16[128,128], index: 7, kind: input, shape index: {}]
  %s8 = inlined_call_operand.vmem [shape: f32[1,128], index: 8, kind: input, shape index: {}]
  %s9 = inlined_call_operand.hbm [shape: f32[16,128], index: 9, kind: output, shape index: {}]
  %s10 = sld [smem:[#allocation0]]
  $region66: #{tpu_custom_call.1} parent=0
    _
  %s12 = ssub.s32 1, %s10
  %s13 = scalar_select 0, %s12, %s10
  $region1: #{tpu_custom_call.1} parent=0
    #allocation2 [shape = 'u8[8192]{0}', space=vmem, size = 0x2000, scoped, tag = 'input window, operand 0, single buffered']
    #allocation3 [shape = 's32[1]{0}', space=sflag, size = 0x4, scoped, tag = 'scoped memory for tpu_custom_call.1']
    #allocation4 [shape = 's32[1]{0}', space=sflag, size = 0x4, scoped, tag = 'scoped memory for tpu_custom_call.1']
    #allocation5 [shape = 'u8[8192]{0}', space=vmem, size = 0x2000, scoped, tag = 'input window, operand 1, single buffered']
    #allocation6 [shape = 's32[1]{0}', space=sflag, size = 0x4, scoped, tag = 'scoped memory for tpu_custom_call.1']
    #allocation7 [shape = 'u8[32768]{0}', space=vmem, size = 0x8000, scoped, tag = 'input window, operand 3, single buffered']
    #allocation8 [shape = 'u8[32768]{0}', space=vmem, size = 0x8000, scoped, tag = 'input window, operand 5, single buffered']
    #allocation9 [shape = 's32[1]{0}', space=sflag, size = 0x4, scoped, tag = 'scoped memory for tpu_custom_call.1']
    #allocation10 [shape = 'u8[32768]{0}', space=vmem, size = 0x8000, scoped, tag = 'input window, operand 7, single buffered']
    #allocation11 [shape = 'u8[8192]{0}', space=vmem, size = 0x2000, scoped, tag = 'output window, operand 0, single buffered']
    %14 = vsyncpa [#allocation3], 0
    %15 = vsyncpa [#allocation6], 0
    %16 = vsyncpa [#allocation9], 0
    %17 = vsyncpa [#allocation4], 0
    // Predicated region
    $region2: #{tpu_custom_call.1} parent=1 // pred_check
      _
    $region3: #{tpu_custom_call.1} parent=1 // pred_check_branch
      %19 = sbr.rel (0) target = $region5
    $region4: #{tpu_custom_call.1} parent=1 // pred_region
      %s21 = ssub.s32 256, 256
      %22 = vsyncadd [#allocation3], %s21
      %s23 = sshll.u32 [#allocation2], 4
      %s24 = int_to_ptr.vmem [resolvable:$true] %s23
      %29 = dma.hbm_to_vmem [thread:$0]  %s0, 256, %s24, [#allocation3], 128, 128, 8
    $region5: #{tpu_custom_call.1} parent=1 // pred_fallthru
      _
    // Predicated region
    $region6: #{tpu_custom_call.1} parent=1 // pred_check
      _
    $region7: #{tpu_custom_call.1} parent=1 // pred_check_branch
      %31 = sbr.rel (0) target = $region9
    $region8: #{tpu_custom_call.1} parent=1 // pred_region
      %s33 = ssub.s32 256, 256
      %34 = vsyncadd [#allocation6], %s33
      %s35 = sshll.u32 [#allocation5], 4
      %s36 = int_to_ptr.vmem [resolvable:$true] %s35
      %41 = dma.hbm_to_vmem [thread:$0]  %s1, 256, %s36, [#allocation6], 64, 64, 4
    $region9: #{tpu_custom_call.1} parent=1 // pred_fallthru
      _
    // Predicated region
    $region10: #{tpu_custom_call.1} parent=1 // pred_check
      _
    $region11: #{tpu_custom_call.1} parent=1 // pred_check_branch
      %43 = sbr.rel (0) target = $region13
    $region12: #{tpu_custom_call.1} parent=1 // pred_region
      _
    $region13: #{tpu_custom_call.1} parent=1 // pred_fallthru
      _
    // Predicated region
    $region14: #{tpu_custom_call.1} parent=1 // pred_check
      _
    $region15: #{tpu_custom_call.1} parent=1 // pred_check_branch
      %45 = sbr.rel (0) target = $region17
    $region16: #{tpu_custom_call.1} parent=1 // pred_region
      %s47 = ssub.s32 1024, 1024
      %48 = vsyncadd [#allocation6], %s47
      %s49 = sshll.u32 [#allocation7], 4
      %s50 = int_to_ptr.vmem [resolvable:$true] %s49
      %55 = dma.hbm_to_vmem [thread:$0]  %s3, 1024, %s50, [#allocation6], 64, 64, 4
    $region17: #{tpu_custom_call.1} parent=1 // pred_fallthru
      _
    // Predicated region
    $region18: #{tpu_custom_call.1} parent=1 // pred_check
      _
    $region19: #{tpu_custom_call.1} parent=1 // pred_check_branch
      %57 = sbr.rel (0) target = $region21
    $region20: #{tpu_custom_call.1} parent=1 // pred_region
      _
    $region21: #{tpu_custom_call.1} parent=1 // pred_fallthru
      _
    // Predicated region
    $region22: #{tpu_custom_call.1} parent=1 // pred_check
      _
    $region23: #{tpu_custom_call.1} parent=1 // pred_check_branch
      %59 = sbr.rel (0) target = $region25
    $region24: #{tpu_custom_call.1} parent=1 // pred_region
      %s61 = ssub.s32 1024, 1024
      %62 = vsyncadd [#allocation9], %s61
      %s63 = sshll.u32 [#allocation8], 4
      %s64 = int_to_ptr.vmem [resolvable:$true] %s63
      %69 = dma.hbm_to_vmem [thread:$0]  %s5, 1024, %s64, [#allocation9], 64, 64, 4
    $region25: #{tpu_custom_call.1} parent=1 // pred_fallthru
      _
    // Predicated region
    $region26: #{tpu_custom_call.1} parent=1 // pred_check
      _
    $region27: #{tpu_custom_call.1} parent=1 // pred_check_branch
      %71 = sbr.rel (0) target = $region29
    $region28: #{tpu_custom_call.1} parent=1 // pred_region
      _
    $region29: #{tpu_custom_call.1} parent=1 // pred_fallthru
      _
    // Predicated region
    $region30: #{tpu_custom_call.1} parent=1 // pred_check
      _
    $region31: #{tpu_custom_call.1} parent=1 // pred_check_branch
      %73 = sbr.rel (0) target = $region33
    $region32: #{tpu_custom_call.1} parent=1 // pred_region
      %s75 = ssub.s32 1024, 1024
      %76 = vsyncadd [#allocation9], %s75
      %s77 = sshll.u32 [#allocation10], 4
      %s78 = int_to_ptr.vmem [resolvable:$true] %s77
      %83 = dma.hbm_to_vmem [thread:$0]  %s7, 1024, %s78, [#allocation9], 64, 64, 4
    $region33: #{tpu_custom_call.1} parent=1 // pred_fallthru
      _
    // Predicated region
    $region34: #{tpu_custom_call.1} parent=1 // pred_check
      _
    $region35: #{tpu_custom_call.1} parent=1 // pred_check_branch
      %85 = sbr.rel (0) target = $region37
    $region36: #{tpu_custom_call.1} parent=1 // pred_region
      _
    $region37: #{tpu_custom_call.1} parent=1 // pred_fallthru
      _
    // Predicated region
    $region38: #{tpu_custom_call.1} parent=1 // pred_check
      _
    $region39: #{tpu_custom_call.1} parent=1 // pred_check_branch
      %87 = sbr.rel (0) target = $region41
    $region40: #{tpu_custom_call.1} parent=1 // pred_region
      %88 = dma.done [#allocation3], 256
    $region41: #{tpu_custom_call.1} parent=1 // pred_fallthru
      _
    // Predicated region
    $region42: #{tpu_custom_call.1} parent=1 // pred_check
      _
    $region43: #{tpu_custom_call.1} parent=1 // pred_check_branch
      %90 = sbr.rel (0) target = $region45
    $region44: #{tpu_custom_call.1} parent=1 // pred_region
      %91 = dma.done [#allocation6], 256
    $region45: #{tpu_custom_call.1} parent=1 // pred_fallthru
      _
    // Predicated region
    $region46: #{tpu_custom_call.1} parent=1 // pred_check
      _
    $region47: #{tpu_custom_call.1} parent=1 // pred_check_branch
      %93 = sbr.rel (0) target = $region49
    $region48: #{tpu_custom_call.1} parent=1 // pred_region
      %94 = dma.done [#allocation6], 1024
    $region49: #{tpu_custom_call.1} parent=1 // pred_fallthru
      _
    // Predicated region
    $region50: #{tpu_custom_call.1} parent=1 // pred_check
      _
    $region51: #{tpu_custom_call.1} parent=1 // pred_check_branch
      %96 = sbr.rel (0) target = $region53
    $region52: #{tpu_custom_call.1} parent=1 // pred_region
      %97 = dma.done [#allocation9], 1024
    $region53: #{tpu_custom_call.1} parent=1 // pred_fallthru
      _
    // Predicated region
    $region54: #{tpu_custom_call.1} parent=1 // pred_check
      _
    $region55: #{tpu_custom_call.1} parent=1 // pred_check_branch
      %99 = sbr.rel (0) target = $region57
    $region56: #{tpu_custom_call.1} parent=1 // pred_region
      %100 = dma.done [#allocation9], 1024
    $region57: #{tpu_custom_call.1} parent=1 // pred_fallthru
      _
    %v102 = vld [vmem:[#allocation2] sm:$0xff]
    %v103 = vld [vmem:[#allocation2 + $0x8] sm:$0xff]
    %v104 = vpack.c.bf16 %v103, %v102
    %v105 = vld [vmem:[#allocation5] sm:$0xf]
    %v106 = vld [vmem:[#allocation5 + $0x4] sm:$0xf]
    %v107 = vld [vmem:[#allocation5 + $0x8] sm:$0xf]
    %v108 = vld [vmem:[#allocation5 + $0xc] sm:$0xf]
    %v109 = vld [vmem:[%s2] sm:$0x1]
    %v111 = vlaneseq
    %v112 = vshrl.u32 %v111, 7
    %v113 = vsub.s32 0, %v112
    %v114 = vrot.slane %v109, %v113
    %v120 = vunpack.c.l.b16 %v105
    %v121 = vunpack.c.l.b16 %v106
    %v122 = vunpack.c.l.b16 %v107
    %v123 = vunpack.c.l.b16 %v108
    %v124 = vpack.c.b16 %v121, %v120
    %v125 = vpack.c.b16 %v123, %v122
    %vm128 = vcmask 261120
    %v130 = vsel %vm128, %v104, 0
    %132 = vmatprep.subr.bf16.mxu0 0
    %133 = vmatpush1.bf16.msra.mxu0 %v124
    %134 = vmatprep.subr.bf16.mxu0 0
    %135 = vmatpush1.bf16.msra.mxu0 %v125
    %136 = vmatprep.subr.bf16.mxu0 0
    %137 = vmatpush1.bf16.msra.mxu0 0
    %138 = vmatprep.subr.bf16.mxu0 0
    %139 = vmatpush1.bf16.msra.mxu0 0
    %140 = vmatprep.subr.bf16.mxu0 0
    %141 = vmatpush1.bf16.msra.mxu0 0
    %142 = vmatprep.subr.bf16.mxu0 0
    %143 = vmatpush1.bf16.msra.mxu0 0
    %144 = vmatprep.subr.bf16.mxu0 0
    %145 = vmatpush1.bf16.msra.mxu0 0
    %146 = vmatprep.subr.bf16.mxu0 0
    %147 = vmatpush1.bf16.msra.mxu0 0
    %148 = vmatprep.subr.bf16.mxu0 0
    %149 = vmatpush1.bf16.msra.mxu0 0
    %150 = vmatprep.subr.bf16.mxu0 0
    %151 = vmatpush1.bf16.msra.mxu0 0
    %152 = vmatprep.subr.bf16.mxu0 0
    %153 = vmatpush1.bf16.msra.mxu0 0
    %154 = vmatprep.subr.bf16.mxu0 0
    %155 = vmatpush1.bf16.msra.mxu0 0
    %156 = vmatprep.subr.bf16.mxu0 0
    %157 = vmatpush1.bf16.msra.mxu0 0
    %158 = vmatprep.subr.bf16.mxu0 0
    %159 = vmatpush1.bf16.msra.mxu0 0
    %160 = vmatprep.subr.bf16.mxu0 0
    %161 = vmatpush1.bf16.msra.mxu0 0
    %162 = vmatprep.subr.bf16.mxu0 0
    %163 = vmatpush1.bf16.msra.mxu0 0
    %164 = vmatprep.mubr.bf16.mxu0 0
    %165 = vmatmul.mubr.bf16.gmra.mrb[0].mxu0 %v130
    %v166 = vpop.f32.mrb[0].mxu0
    %v167 = vadd.f32 %v114, %v166
    %v168 = vpop.f32.mrb[0].mxu0
    %v169 = vpop.f32.mrb[0].mxu0
    %v170 = vadd.f32 %v114, %v169
    %v171 = vpop.f32.mrb[0].mxu0
    %172 = vdwg.mxu0
    %v173 = vmax.f32 %v167, 0.0
    %v174 = vmax.f32 %v170, 0.0
    %v175 = vpack.c.bf16 %v174, %v173
    %v176 = vld [vmem:[#allocation7] sm:$0xf]
    %v177 = vld [vmem:[#allocation7 + $0x4] sm:$0xf]
    %v178 = vld [vmem:[#allocation7 + $0x8] sm:$0xf]
    %v179 = vld [vmem:[#allocation7 + $0xc] sm:$0xf]
    %v180 = vld [vmem:[#allocation7 + $0x10] sm:$0xf]
    %v181 = vld [vmem:[#allocation7 + $0x14] sm:$0xf]
    %v182 = vld [vmem:[#allocation7 + $0x18] sm:$0xf]
    %v183 = vld [vmem:[#allocation7 + $0x1c] sm:$0xf]
    %v184 = vld [vmem:[#allocation7 + $0x20] sm:$0xf]
    %v185 = vld [vmem:[#allocation7 + $0x24] sm:$0xf]
    %v186 = vld [vmem:[#allocation7 + $0x28] sm:$0xf]
    %v187 = vld [vmem:[#allocation7 + $0x2c] sm:$0xf]
    %v188 = vld [vmem:[#allocation7 + $0x30] sm:$0xf]
    %v189 = vld [vmem:[#allocation7 + $0x34] sm:$0xf]
    %v190 = vld [vmem:[#allocation7 + $0x38] sm:$0xf]
    %v191 = vld [vmem:[#allocation7 + $0x3c] sm:$0xf]
    %v192 = vld [vmem:[%s4] sm:$0x1]
    %v194 = vlaneseq
    %v195 = vshrl.u32 %v194, 7
    %v196 = vsub.s32 0, %v195
    %v197 = vrot.slane %v192, %v196
    %v215 = vunpack.c.l.b16 %v176
    %v216 = vunpack.c.l.b16 %v177
    %v217 = vunpack.c.l.b16 %v178
    %v218 = vunpack.c.l.b16 %v179
    %v219 = vunpack.c.l.b16 %v180
    %v220 = vunpack.c.l.b16 %v181
    %v221 = vunpack.c.l.b16 %v182
    %v222 = vunpack.c.l.b16 %v183
    %v223 = vunpack.c.l.b16 %v184
    %v224 = vunpack.c.l.b16 %v185
    %v225 = vunpack.c.l.b16 %v186
    %v226 = vunpack.c.l.b16 %v187
    %v227 = vunpack.c.l.b16 %v188
    %v228 = vunpack.c.l.b16 %v189
    %v229 = vunpack.c.l.b16 %v190
    %v230 = vunpack.c.l.b16 %v191
    %v231 = vpack.c.b16 %v216, %v215
    %v232 = vpack.c.b16 %v218, %v217
    %v233 = vpack.c.b16 %v220, %v219
    %v234 = vpack.c.b16 %v222, %v221
    %v235 = vpack.c.b16 %v224, %v223
    %v236 = vpack.c.b16 %v226, %v225
    %v237 = vpack.c.b16 %v228, %v227
    %v238 = vpack.c.b16 %v230, %v229
    %247 = vmatprep.subr.bf16.mxu0 0
    %248 = vmatpush1.bf16.msra.mxu0 %v231
    %249 = vmatprep.subr.bf16.mxu0 0
    %250 = vmatpush1.bf16.msra.mxu0 %v232
    %251 = vmatprep.subr.bf16.mxu0 0
    %252 = vmatpush1.bf16.msra.mxu0 %v233
    %253 = vmatprep.subr.bf16.mxu0 0
    %254 = vmatpush1.bf16.msra.mxu0 %v234
    %255 = vmatprep.subr.bf16.mxu0 0
    %256 = vmatpush1.bf16.msra.mxu0 %v235
    %257 = vmatprep.subr.bf16.mxu0 0
    %258 = vmatpush1.bf16.msra.mxu0 %v236
    %259 = vmatprep.subr.bf16.mxu0 0
    %260 = vmatpush1.bf16.msra.mxu0 %v237
    %261 = vmatprep.subr.bf16.mxu0 0
    %262 = vmatpush1.bf16.msra.mxu0 %v238
    %263 = vmatprep.subr.bf16.mxu0 0
    %264 = vmatpush1.bf16.msra.mxu0 0
    %265 = vmatprep.subr.bf16.mxu0 0
    %266 = vmatpush1.bf16.msra.mxu0 0
    %267 = vmatprep.subr.bf16.mxu0 0
    %268 = vmatpush1.bf16.msra.mxu0 0
    %269 = vmatprep.subr.bf16.mxu0 0
    %270 = vmatpush1.bf16.msra.mxu0 0
    %271 = vmatprep.subr.bf16.mxu0 0
    %272 = vmatpush1.bf16.msra.mxu0 0
    %273 = vmatprep.subr.bf16.mxu0 0
    %274 = vmatpush1.bf16.msra.mxu0 0
    %275 = vmatprep.subr.bf16.mxu0 0
    %276 = vmatpush1.bf16.msra.mxu0 0
    %277 = vmatprep.subr.bf16.mxu0 0
    %278 = vmatpush1.bf16.msra.mxu0 0
    %279 = vmatprep.mubr.bf16.mxu0 0
    %280 = vmatmul.mubr.bf16.gmra.mrb[0].mxu0 %v175
    %v281 = vpop.f32.mrb[0].mxu0
    %v282 = vadd.f32 %v197, %v281
    %v283 = vpop.f32.mrb[0].mxu0
    %v284 = vpop.f32.mrb[0].mxu0
    %v285 = vadd.f32 %v197, %v284
    %v286 = vpop.f32.mrb[0].mxu0
    %287 = vdwg.mxu0
    %v288 = vmax.f32 %v282, 0.0
    %v289 = vmax.f32 %v285, 0.0
    %v290 = vpack.c.bf16 %v289, %v288
    %v291 = vld [vmem:[#allocation8] sm:$0xf]
    %v292 = vld [vmem:[#allocation8 + $0x4] sm:$0xf]
    %v293 = vld [vmem:[#allocation8 + $0x8] sm:$0xf]
    %v294 = vld [vmem:[#allocation8 + $0xc] sm:$0xf]
    %v295 = vld [vmem:[#allocation8 + $0x10] sm:$0xf]
    %v296 = vld [vmem:[#allocation8 + $0x14] sm:$0xf]
    %v297 = vld [vmem:[#allocation8 + $0x18] sm:$0xf]
    %v298 = vld [vmem:[#allocation8 + $0x1c] sm:$0xf]
    %v299 = vld [vmem:[#allocation8 + $0x20] sm:$0xf]
    %v300 = vld [vmem:[#allocation8 + $0x24] sm:$0xf]
    %v301 = vld [vmem:[#allocation8 + $0x28] sm:$0xf]
    %v302 = vld [vmem:[#allocation8 + $0x2c] sm:$0xf]
    %v303 = vld [vmem:[#allocation8 + $0x30] sm:$0xf]
    %v304 = vld [vmem:[#allocation8 + $0x34] sm:$0xf]
    %v305 = vld [vmem:[#allocation8 + $0x38] sm:$0xf]
    %v306 = vld [vmem:[#allocation8 + $0x3c] sm:$0xf]
    %v307 = vld [vmem:[%s6] sm:$0x1]
    %v309 = vlaneseq
    %v310 = vshrl.u32 %v309, 7
    %v311 = vsub.s32 0, %v310
    %v312 = vrot.slane %v307, %v311
    %v330 = vunpack.c.l.b16 %v291
    %v331 = vunpack.c.l.b16 %v292
    %v332 = vunpack.c.l.b16 %v293
    %v333 = vunpack.c.l.b16 %v294
    %v334 = vunpack.c.l.b16 %v295
    %v335 = vunpack.c.l.b16 %v296
    %v336 = vunpack.c.l.b16 %v297
    %v337 = vunpack.c.l.b16 %v298
    %v338 = vunpack.c.l.b16 %v299
    %v339 = vunpack.c.l.b16 %v300
    %v340 = vunpack.c.l.b16 %v301
    %v341 = vunpack.c.l.b16 %v302
    %v342 = vunpack.c.l.b16 %v303
    %v343 = vunpack.c.l.b16 %v304
    %v344 = vunpack.c.l.b16 %v305
    %v345 = vunpack.c.l.b16 %v306
    %v346 = vpack.c.b16 %v331, %v330
    %v347 = vpack.c.b16 %v333, %v332
    %v348 = vpack.c.b16 %v335, %v334
    %v349 = vpack.c.b16 %v337, %v336
    %v350 = vpack.c.b16 %v339, %v338
    %v351 = vpack.c.b16 %v341, %v340
    %v352 = vpack.c.b16 %v343, %v342
    %v353 = vpack.c.b16 %v345, %v344
    %362 = vmatprep.subr.bf16.mxu0 0
    %363 = vmatpush1.bf16.msra.mxu0 %v346
    %364 = vmatprep.subr.bf16.mxu0 0
    %365 = vmatpush1.bf16.msra.mxu0 %v347
    %366 = vmatprep.subr.bf16.mxu0 0
    %367 = vmatpush1.bf16.msra.mxu0 %v348
    %368 = vmatprep.subr.bf16.mxu0 0
    %369 = vmatpush1.bf16.msra.mxu0 %v349
    %370 = vmatprep.subr.bf16.mxu0 0
    %371 = vmatpush1.bf16.msra.mxu0 %v350
    %372 = vmatprep.subr.bf16.mxu0 0
    %373 = vmatpush1.bf16.msra.mxu0 %v351
    %374 = vmatprep.subr.bf16.mxu0 0
    %375 = vmatpush1.bf16.msra.mxu0 %v352
    %376 = vmatprep.subr.bf16.mxu0 0
    %377 = vmatpush1.bf16.msra.mxu0 %v353
    %378 = vmatprep.subr.bf16.mxu0 0
    %379 = vmatpush1.bf16.msra.mxu0 0
    %380 = vmatprep.subr.bf16.mxu0 0
    %381 = vmatpush1.bf16.msra.mxu0 0
    %382 = vmatprep.subr.bf16.mxu0 0
    %383 = vmatpush1.bf16.msra.mxu0 0
    %384 = vmatprep.subr.bf16.mxu0 0
    %385 = vmatpush1.bf16.msra.mxu0 0
    %386 = vmatprep.subr.bf16.mxu0 0
    %387 = vmatpush1.bf16.msra.mxu0 0
    %388 = vmatprep.subr.bf16.mxu0 0
    %389 = vmatpush1.bf16.msra.mxu0 0
    %390 = vmatprep.subr.bf16.mxu0 0
    %391 = vmatpush1.bf16.msra.mxu0 0
    %392 = vmatprep.subr.bf16.mxu0 0
    %393 = vmatpush1.bf16.msra.mxu0 0
    %394 = vmatprep.mubr.bf16.mxu0 0
    %395 = vmatmul.mubr.bf16.gmra.mrb[0].mxu0 %v290
    %v396 = vpop.f32.mrb[0].mxu0
    %v397 = vadd.f32 %v312, %v396
    %v398 = vpop.f32.mrb[0].mxu0
    %v399 = vpop.f32.mrb[0].mxu0
    %v400 = vadd.f32 %v312, %v399
    %v401 = vpop.f32.mrb[0].mxu0
    %402 = vdwg.mxu0
    %v403 = vmax.f32 %v397, 0.0
    %v404 = vmax.f32 %v400, 0.0
    %v405 = vpack.c.bf16 %v404, %v403
    %v406 = vld [vmem:[#allocation10] sm:$0xf]
    %v407 = vld [vmem:[#allocation10 + $0x4] sm:$0xf]
    %v408 = vld [vmem:[#allocation10 + $0x8] sm:$0xf]
    %v409 = vld [vmem:[#allocation10 + $0xc] sm:$0xf]
    %v410 = vld [vmem:[#allocation10 + $0x10] sm:$0xf]
    %v411 = vld [vmem:[#allocation10 + $0x14] sm:$0xf]
    %v412 = vld [vmem:[#allocation10 + $0x18] sm:$0xf]
    %v413 = vld [vmem:[#allocation10 + $0x1c] sm:$0xf]
    %v414 = vld [vmem:[#allocation10 + $0x20] sm:$0xf]
    %v415 = vld [vmem:[#allocation10 + $0x24] sm:$0xf]
    %v416 = vld [vmem:[#allocation10 + $0x28] sm:$0xf]
    %v417 = vld [vmem:[#allocation10 + $0x2c] sm:$0xf]
    %v418 = vld [vmem:[#allocation10 + $0x30] sm:$0xf]
    %v419 = vld [vmem:[#allocation10 + $0x34] sm:$0xf]
    %v420 = vld [vmem:[#allocation10 + $0x38] sm:$0xf]
    %v421 = vld [vmem:[#allocation10 + $0x3c] sm:$0xf]
    %v422 = vld [vmem:[%s8] sm:$0x1]
    %v424 = vlaneseq
    %v425 = vshrl.u32 %v424, 7
    %v426 = vsub.s32 0, %v425
    %v427 = vrot.slane %v422, %v426
    %v445 = vunpack.c.l.b16 %v406
    %v446 = vunpack.c.l.b16 %v407
    %v447 = vunpack.c.l.b16 %v408
    %v448 = vunpack.c.l.b16 %v409
    %v449 = vunpack.c.l.b16 %v410
    %v450 = vunpack.c.l.b16 %v411
    %v451 = vunpack.c.l.b16 %v412
    %v452 = vunpack.c.l.b16 %v413
    %v453 = vunpack.c.l.b16 %v414
    %v454 = vunpack.c.l.b16 %v415
    %v455 = vunpack.c.l.b16 %v416
    %v456 = vunpack.c.l.b16 %v417
    %v457 = vunpack.c.l.b16 %v418
    %v458 = vunpack.c.l.b16 %v419
    %v459 = vunpack.c.l.b16 %v420
    %v460 = vunpack.c.l.b16 %v421
    %v461 = vpack.c.b16 %v446, %v445
    %v462 = vpack.c.b16 %v448, %v447
    %v463 = vpack.c.b16 %v450, %v449
    %v464 = vpack.c.b16 %v452, %v451
    %v465 = vpack.c.b16 %v454, %v453
    %v466 = vpack.c.b16 %v456, %v455
    %v467 = vpack.c.b16 %v458, %v457
    %v468 = vpack.c.b16 %v460, %v459
    %477 = vmatprep.subr.bf16.mxu0 0
    %478 = vmatpush1.bf16.msra.mxu0 %v461
    %479 = vmatprep.subr.bf16.mxu0 0
    %480 = vmatpush1.bf16.msra.mxu0 %v462
    %481 = vmatprep.subr.bf16.mxu0 0
    %482 = vmatpush1.bf16.msra.mxu0 %v463
    %483 = vmatprep.subr.bf16.mxu0 0
    %484 = vmatpush1.bf16.msra.mxu0 %v464
    %485 = vmatprep.subr.bf16.mxu0 0
    %486 = vmatpush1.bf16.msra.mxu0 %v465
    %487 = vmatprep.subr.bf16.mxu0 0
    %488 = vmatpush1.bf16.msra.mxu0 %v466
    %489 = vmatprep.subr.bf16.mxu0 0
    %490 = vmatpush1.bf16.msra.mxu0 %v467
    %491 = vmatprep.subr.bf16.mxu0 0
    %492 = vmatpush1.bf16.msra.mxu0 %v468
    %493 = vmatprep.subr.bf16.mxu0 0
    %494 = vmatpush1.bf16.msra.mxu0 0
    %495 = vmatprep.subr.bf16.mxu0 0
    %496 = vmatpush1.bf16.msra.mxu0 0
    %497 = vmatprep.subr.bf16.mxu0 0
    %498 = vmatpush1.bf16.msra.mxu0 0
    %499 = vmatprep.subr.bf16.mxu0 0
    %500 = vmatpush1.bf16.msra.mxu0 0
    %501 = vmatprep.subr.bf16.mxu0 0
    %502 = vmatpush1.bf16.msra.mxu0 0
    %503 = vmatprep.subr.bf16.mxu0 0
    %504 = vmatpush1.bf16.msra.mxu0 0
    %505 = vmatprep.subr.bf16.mxu0 0
    %506 = vmatpush1.bf16.msra.mxu0 0
    %507 = vmatprep.subr.bf16.mxu0 0
    %508 = vmatpush1.bf16.msra.mxu0 0
    %509 = vmatprep.mubr.bf16.mxu0 0
    %510 = vmatmul.mubr.bf16.gmra.mrb[0].mxu0 %v405
    %v511 = vpop.f32.mrb[0].mxu0
    %v512 = vadd.f32 %v427, %v511
    %v513 = vpop.f32.mrb[0].mxu0
    %v514 = vpop.f32.mrb[0].mxu0
    %v515 = vadd.f32 %v427, %v514
    %v516 = vpop.f32.mrb[0].mxu0
    %517 = vdwg.mxu0
    %518 = vst [vmem:[#allocation11] sm:$0xff] %v512
    %519 = vst [vmem:[#allocation11 + $0x8] sm:$0xff] %v515
    // Predicated region
    $region58: #{tpu_custom_call.1} parent=1 // pred_check
      _
    $region59: #{tpu_custom_call.1} parent=1 // pred_check_branch
      %521 = sbr.rel (0) target = $region61
    $region60: #{tpu_custom_call.1} parent=1 // pred_region
      %s523 = ssub.s32 256, 256
      %524 = vsyncadd [#allocation4], %s523
      %s525 = sshll.u32 [#allocation11], 4
      %s526 = int_to_ptr.vmem [resolvable:$true] %s525
      %531 = dma.vmem_to_hbm [thread:$0]  %s526, 256, %s9, [#allocation4], 128, 128, 8
    $region61: #{tpu_custom_call.1} parent=1 // pred_fallthru
      _
    // Predicated region
    $region62: #{tpu_custom_call.1} parent=1 // pred_check
      _
    $region63: #{tpu_custom_call.1} parent=1 // pred_check_branch
      %533 = sbr.rel (0) target = $region65
    $region64: #{tpu_custom_call.1} parent=1 // pred_region
      %534 = dma.done [#allocation4], 256
    $region65: #{tpu_custom_call.1} parent=1 // pred_fallthru
      _
    %535 = vsyncpa [#allocation3], 1
    %536 = vsyncpa [#allocation6], 1
    %537 = vsyncpa [#allocation9], 1
    %538 = vsyncpa [#allocation4], 1

// kernel: tpu_custom_call.1
$region0: #{tpu_custom_call.1}
  #allocation0 [shape = 'u32[]', space=smem, size = 0x4, offset = 0x4, fixed_abs, tag = 'smem constant byte address 0x4 - core index']
  #allocation1 [shape = 'u32[144,128]{1,0:T(1,128)}', space=vmem, size = 0x12000, scoped, tag = 'internal scratch']
  %s0 = inlined_call_operand.hbm [shape: f32[16,32], index: 0, kind: input, shape index: {}]
  %s1 = inlined_call_operand.hbm [shape: bf16[32,128], index: 1, kind: input, shape index: {}]
  %s2 = inlined_call_operand.vmem [shape: f32[1,128], index: 2, kind: input, shape index: {}]
  %s3 = inlined_call_operand.hbm [shape: bf16[128,128], index: 3, kind: input, shape index: {}]
  %s4 = inlined_call_operand.vmem [shape: f32[1,128], index: 4, kind: input, shape index: {}]
  %s5 = inlined_call_operand.hbm [shape: bf16[128,128], index: 5, kind: input, shape index: {}]
  %s6 = inlined_call_operand.vmem [shape: f32[1,128], index: 6, kind: input, shape index: {}]
  %s7 = inlined_call_operand.hbm [shape: bf16[128,128], index: 7, kind: input, shape index: {}]
  %s8 = inlined_call_operand.vmem [shape: f32[1,128], index: 8, kind: input, shape index: {}]
  %s9 = inlined_call_operand.hbm [shape: f32[16,128], index: 9, kind: output, shape index: {}]
  %s10 = sld [smem:[#allocation0]]
  $region66: #{tpu_custom_call.1} parent=0
    _
  %s12 = ssub.s32 1, %s10
  %s13 = scalar_select 0, %s12, %s10
  $region1: #{tpu_custom_call.1} parent=0
    #allocation2 [shape = 'u8[8192]{0}', space=vmem, size = 0x2000, scoped, tag = 'input window, operand 0, single buffered']
    #allocation3 [shape = 's32[1]{0}', space=sflag, size = 0x4, scoped, tag = 'scoped memory for tpu_custom_call.1']
    #allocation4 [shape = 's32[1]{0}', space=sflag, size = 0x4, scoped, tag = 'scoped memory for tpu_custom_call.1']
    #allocation5 [shape = 'u8[8192]{0}', space=vmem, size = 0x2000, scoped, tag = 'input window, operand 1, single buffered']
    #allocation6 [shape = 's32[1]{0}', space=sflag, size = 0x4, scoped, tag = 'scoped memory for tpu_custom_call.1']
    #allocation7 [shape = 'u8[32768]{0}', space=vmem, size = 0x8000, scoped, tag = 'input window, operand 3, single buffered']
    #allocation8 [shape = 'u8[32768]{0}', space=vmem, size = 0x8000, scoped, tag = 'input window, operand 5, single buffered']
    #allocation9 [shape = 's32[1]{0}', space=sflag, size = 0x4, scoped, tag = 'scoped memory for tpu_custom_call.1']
    #allocation10 [shape = 'u8[32768]{0}', space=vmem, size = 0x8000, scoped, tag = 'input window, operand 7, single buffered']
    #allocation11 [shape = 'u8[8192]{0}', space=vmem, size = 0x2000, scoped, tag = 'output window, operand 0, single buffered']
    %14 = vsyncpa [#allocation3], 0
    %15 = vsyncpa [#allocation6], 0
    %16 = vsyncpa [#allocation9], 0
    %17 = vsyncpa [#allocation4], 0
    // Predicated region
    $region2: #{tpu_custom_call.1} parent=1 // pred_check
      _
    $region3: #{tpu_custom_call.1} parent=1 // pred_check_branch
      %19 = sbr.rel (0) target = $region5
    $region4: #{tpu_custom_call.1} parent=1 // pred_region
      %s21 = ssub.s32 256, 256
      %22 = vsyncadd [#allocation3], %s21
      %s23 = sshll.u32 [#allocation2], 4
      %s24 = int_to_ptr.vmem [resolvable:$true] %s23
      %29 = dma.hbm_to_vmem [thread:$0]  %s0, 256, %s24, [#allocation3], 128, 128, 8
    $region5: #{tpu_custom_call.1} parent=1 // pred_fallthru
      _
    // Predicated region
    $region6: #{tpu_custom_call.1} parent=1 // pred_check
      _
    $region7: #{tpu_custom_call.1} parent=1 // pred_check_branch
      %31 = sbr.rel (0) target = $region9
    $region8: #{tpu_custom_call.1} parent=1 // pred_region
      %s33 = ssub.s32 256, 256
      %34 = vsyncadd [#allocation6], %s33
      %s35 = sshll.u32 [#allocation5], 4
      %s36 = int_to_ptr.vmem [resolvable:$true] %s35
      %41 = dma.hbm_to_vmem [thread:$0]  %s1, 256, %s36, [#allocation6], 64, 64, 4
    $region9: #{tpu_custom_call.1} parent=1 // pred_fallthru
      _
    // Predicated region
    $region10: #{tpu_custom_call.1} parent=1 // pred_check
      _
    $region11: #{tpu_custom_call.1} parent=1 // pred_check_branch
      %43 = sbr.rel (0) target = $region13
    $region12: #{tpu_custom_call.1} parent=1 // pred_region
      _
    $region13: #{tpu_custom_call.1} parent=1 // pred_fallthru
      _
    // Predicated region
    $region14: #{tpu_custom_call.1} parent=1 // pred_check
      _
    $region15: #{tpu_custom_call.1} parent=1 // pred_check_branch
      %45 = sbr.rel (0) target = $region17
    $region16: #{tpu_custom_call.1} parent=1 // pred_region
      %s47 = ssub.s32 1024, 1024
      %48 = vsyncadd [#allocation6], %s47
      %s49 = sshll.u32 [#allocation7], 4
      %s50 = int_to_ptr.vmem [resolvable:$true] %s49
      %55 = dma.hbm_to_vmem [thread:$0]  %s3, 1024, %s50, [#allocation6], 64, 64, 4
    $region17: #{tpu_custom_call.1} parent=1 // pred_fallthru
      _
    // Predicated region
    $region18: #{tpu_custom_call.1} parent=1 // pred_check
      _
    $region19: #{tpu_custom_call.1} parent=1 // pred_check_branch
      %57 = sbr.rel (0) target = $region21
    $region20: #{tpu_custom_call.1} parent=1 // pred_region
      _
    $region21: #{tpu_custom_call.1} parent=1 // pred_fallthru
      _
    // Predicated region
    $region22: #{tpu_custom_call.1} parent=1 // pred_check
      _
    $region23: #{tpu_custom_call.1} parent=1 // pred_check_branch
      %59 = sbr.rel (0) target = $region25
    $region24: #{tpu_custom_call.1} parent=1 // pred_region
      %s61 = ssub.s32 1024, 1024
      %62 = vsyncadd [#allocation9], %s61
      %s63 = sshll.u32 [#allocation8], 4
      %s64 = int_to_ptr.vmem [resolvable:$true] %s63
      %69 = dma.hbm_to_vmem [thread:$0]  %s5, 1024, %s64, [#allocation9], 64, 64, 4
    $region25: #{tpu_custom_call.1} parent=1 // pred_fallthru
      _
    // Predicated region
    $region26: #{tpu_custom_call.1} parent=1 // pred_check
      _
    $region27: #{tpu_custom_call.1} parent=1 // pred_check_branch
      %71 = sbr.rel (0) target = $region29
    $region28: #{tpu_custom_call.1} parent=1 // pred_region
      _
    $region29: #{tpu_custom_call.1} parent=1 // pred_fallthru
      _
    // Predicated region
    $region30: #{tpu_custom_call.1} parent=1 // pred_check
      _
    $region31: #{tpu_custom_call.1} parent=1 // pred_check_branch
      %73 = sbr.rel (0) target = $region33
    $region32: #{tpu_custom_call.1} parent=1 // pred_region
      %s75 = ssub.s32 1024, 1024
      %76 = vsyncadd [#allocation9], %s75
      %s77 = sshll.u32 [#allocation10], 4
      %s78 = int_to_ptr.vmem [resolvable:$true] %s77
      %83 = dma.hbm_to_vmem [thread:$0]  %s7, 1024, %s78, [#allocation9], 64, 64, 4
    $region33: #{tpu_custom_call.1} parent=1 // pred_fallthru
      _
    // Predicated region
    $region34: #{tpu_custom_call.1} parent=1 // pred_check
      _
    $region35: #{tpu_custom_call.1} parent=1 // pred_check_branch
      %85 = sbr.rel (0) target = $region37
    $region36: #{tpu_custom_call.1} parent=1 // pred_region
      _
    $region37: #{tpu_custom_call.1} parent=1 // pred_fallthru
      _
    // Predicated region
    $region38: #{tpu_custom_call.1} parent=1 // pred_check
      _
    $region39: #{tpu_custom_call.1} parent=1 // pred_check_branch
      %87 = sbr.rel (0) target = $region41
    $region40: #{tpu_custom_call.1} parent=1 // pred_region
      %88 = dma.done [#allocation3], 256
    $region41: #{tpu_custom_call.1} parent=1 // pred_fallthru
      _
    // Predicated region
    $region42: #{tpu_custom_call.1} parent=1 // pred_check
      _
    $region43: #{tpu_custom_call.1} parent=1 // pred_check_branch
      %90 = sbr.rel (0) target = $region45
    $region44: #{tpu_custom_call.1} parent=1 // pred_region
      %91 = dma.done [#allocation6], 256
    $region45: #{tpu_custom_call.1} parent=1 // pred_fallthru
      _
    // Predicated region
    $region46: #{tpu_custom_call.1} parent=1 // pred_check
      _
    $region47: #{tpu_custom_call.1} parent=1 // pred_check_branch
      %93 = sbr.rel (0) target = $region49
    $region48: #{tpu_custom_call.1} parent=1 // pred_region
      %94 = dma.done [#allocation6], 1024
    $region49: #{tpu_custom_call.1} parent=1 // pred_fallthru
      _
    // Predicated region
    $region50: #{tpu_custom_call.1} parent=1 // pred_check
      _
    $region51: #{tpu_custom_call.1} parent=1 // pred_check_branch
      %96 = sbr.rel (0) target = $region53
    $region52: #{tpu_custom_call.1} parent=1 // pred_region
      %97 = dma.done [#allocation9], 1024
    $region53: #{tpu_custom_call.1} parent=1 // pred_fallthru
      _
    // Predicated region
    $region54: #{tpu_custom_call.1} parent=1 // pred_check
      _
    $region55: #{tpu_custom_call.1} parent=1 // pred_check_branch
      %99 = sbr.rel (0) target = $region57
    $region56: #{tpu_custom_call.1} parent=1 // pred_region
      %100 = dma.done [#allocation9], 1024
    $region57: #{tpu_custom_call.1} parent=1 // pred_fallthru
      _
    %v102 = vld [vmem:[#allocation2] sm:$0xff]
    %v103 = vld [vmem:[#allocation2 + $0x8] sm:$0xff]
    %v104 = vpack.c.bf16 %v103, %v102
    %v105 = vld [vmem:[#allocation5] sm:$0xf]
    %v106 = vld [vmem:[#allocation5 + $0x4] sm:$0xf]
    %v107 = vld [vmem:[#allocation5 + $0x8] sm:$0xf]
    %v108 = vld [vmem:[#allocation5 + $0xc] sm:$0xf]
    %v109 = vld [vmem:[%s2] sm:$0x1]
    %v111 = vlaneseq
    %v112 = vshrl.u32 %v111, 7
    %v113 = vsub.s32 0, %v112
    %v114 = vrot.slane %v109, %v113
    %v120 = vunpack.c.l.b16 %v105
    %v121 = vunpack.c.l.b16 %v106
    %v122 = vunpack.c.l.b16 %v107
    %v123 = vunpack.c.l.b16 %v108
    %v124 = vpack.c.b16 %v121, %v120
    %v125 = vpack.c.b16 %v123, %v122
    %vm128 = vcmask 261120
    %v130 = vsel %vm128, %v104, 0
    %132 = vmatprep.subr.bf16.mxu0 0
    %133 = vmatpush1.bf16.msra.mxu0 %v124
    %134 = vmatprep.subr.bf16.mxu0 0
    %135 = vmatpush1.bf16.msra.mxu0 %v125
    %136 = vmatprep.subr.bf16.mxu0 0
    %137 = vmatpush1.bf16.msra.mxu0 0
    %138 = vmatprep.subr.bf16.mxu0 0
    %139 = vmatpush1.bf16.msra.mxu0 0
    %140 = vmatprep.subr.bf16.mxu0 0
    %141 = vmatpush1.bf16.msra.mxu0 0
    %142 = vmatprep.subr.bf16.mxu0 0
    %143 = vmatpush1.bf16.msra.mxu0 0
    %144 = vmatprep.subr.bf16.mxu0 0
    %145 = vmatpush1.bf16.msra.mxu0 0
    %146 = vmatprep.subr.bf16.mxu0 0
    %147 = vmatpush1.bf16.msra.mxu0 0
    %148 = vmatprep.subr.bf16.mxu0 0
    %149 = vmatpush1.bf16.msra.mxu0 0
    %150 = vmatprep.subr.bf16.mxu0 0
    %151 = vmatpush1.bf16.msra.mxu0 0
    %152 = vmatprep.subr.bf16.mxu0 0
    %153 = vmatpush1.bf16.msra.mxu0 0
    %154 = vmatprep.subr.bf16.mxu0 0
    %155 = vmatpush1.bf16.msra.mxu0 0
    %156 = vmatprep.subr.bf16.mxu0 0
    %157 = vmatpush1.bf16.msra.mxu0 0
    %158 = vmatprep.subr.bf16.mxu0 0
    %159 = vmatpush1.bf16.msra.mxu0 0
    %160 = vmatprep.subr.bf16.mxu0 0
    %161 = vmatpush1.bf16.msra.mxu0 0
    %162 = vmatprep.subr.bf16.mxu0 0
    %163 = vmatpush1.bf16.msra.mxu0 0
    %164 = vmatprep.mubr.bf16.mxu0 0
    %165 = vmatmul.mubr.bf16.gmra.mrb[0].mxu0 %v130
    %v166 = vpop.f32.mrb[0].mxu0
    %v167 = vadd.f32 %v114, %v166
    %v168 = vpop.f32.mrb[0].mxu0
    %v169 = vpop.f32.mrb[0].mxu0
    %v170 = vadd.f32 %v114, %v169
    %v171 = vpop.f32.mrb[0].mxu0
    %172 = vdwg.mxu0
    %v173 = vmax.f32 %v167, 0.0
    %v174 = vmax.f32 %v170, 0.0
    %v175 = vpack.c.bf16 %v174, %v173
    %v176 = vld [vmem:[#allocation7] sm:$0xf]
    %v177 = vld [vmem:[#allocation7 + $0x4] sm:$0xf]
    %v178 = vld [vmem:[#allocation7 + $0x8] sm:$0xf]
    %v179 = vld [vmem:[#allocation7 + $0xc] sm:$0xf]
    %v180 = vld [vmem:[#allocation7 + $0x10] sm:$0xf]
    %v181 = vld [vmem:[#allocation7 + $0x14] sm:$0xf]
    %v182 = vld [vmem:[#allocation7 + $0x18] sm:$0xf]
    %v183 = vld [vmem:[#allocation7 + $0x1c] sm:$0xf]
    %v184 = vld [vmem:[#allocation7 + $0x20] sm:$0xf]
    %v185 = vld [vmem:[#allocation7 + $0x24] sm:$0xf]
    %v186 = vld [vmem:[#allocation7 + $0x28] sm:$0xf]
    %v187 = vld [vmem:[#allocation7 + $0x2c] sm:$0xf]
    %v188 = vld [vmem:[#allocation7 + $0x30] sm:$0xf]
    %v189 = vld [vmem:[#allocation7 + $0x34] sm:$0xf]
    %v190 = vld [vmem:[#allocation7 + $0x38] sm:$0xf]
    %v191 = vld [vmem:[#allocation7 + $0x3c] sm:$0xf]
    %v192 = vld [vmem:[%s4] sm:$0x1]
    %v194 = vlaneseq
    %v195 = vshrl.u32 %v194, 7
    %v196 = vsub.s32 0, %v195
    %v197 = vrot.slane %v192, %v196
    %v215 = vunpack.c.l.b16 %v176
    %v216 = vunpack.c.l.b16 %v177
    %v217 = vunpack.c.l.b16 %v178
    %v218 = vunpack.c.l.b16 %v179
    %v219 = vunpack.c.l.b16 %v180
    %v220 = vunpack.c.l.b16 %v181
    %v221 = vunpack.c.l.b16 %v182
    %v222 = vunpack.c.l.b16 %v183
    %v223 = vunpack.c.l.b16 %v184
    %v224 = vunpack.c.l.b16 %v185
    %v225 = vunpack.c.l.b16 %v186
    %v226 = vunpack.c.l.b16 %v187
    %v227 = vunpack.c.l.b16 %v188
    %v228 = vunpack.c.l.b16 %v189
    %v229 = vunpack.c.l.b16 %v190
    %v230 = vunpack.c.l.b16 %v191
    %v231 = vpack.c.b16 %v216, %v215
    %v232 = vpack.c.b16 %v218, %v217
    %v233 = vpack.c.b16 %v220, %v219
    %v234 = vpack.c.b16 %v222, %v221
    %v235 = vpack.c.b16 %v224, %v223
    %v236 = vpack.c.b16 %v226, %v225
    %v237 = vpack.c.b16 %v228, %v227
    %v238 = vpack.c.b16 %v230, %v229
    %247 = vmatprep.subr.bf16.mxu0 0
    %248 = vmatpush1.bf16.msra.mxu0 %v231
    %249 = vmatprep.subr.bf16.mxu0 0
    %250 = vmatpush1.bf16.msra.mxu0 %v232
    %251 = vmatprep.subr.bf16.mxu0 0
    %252 = vmatpush1.bf16.msra.mxu0 %v233
    %253 = vmatprep.subr.bf16.mxu0 0
    %254 = vmatpush1.bf16.msra.mxu0 %v234
    %255 = vmatprep.subr.bf16.mxu0 0
    %256 = vmatpush1.bf16.msra.mxu0 %v235
    %257 = vmatprep.subr.bf16.mxu0 0
    %258 = vmatpush1.bf16.msra.mxu0 %v236
    %259 = vmatprep.subr.bf16.mxu0 0
    %260 = vmatpush1.bf16.msra.mxu0 %v237
    %261 = vmatprep.subr.bf16.mxu0 0
    %262 = vmatpush1.bf16.msra.mxu0 %v238
    %263 = vmatprep.subr.bf16.mxu0 0
    %264 = vmatpush1.bf16.msra.mxu0 0
    %265 = vmatprep.subr.bf16.mxu0 0
    %266 = vmatpush1.bf16.msra.mxu0 0
    %267 = vmatprep.subr.bf16.mxu0 0
    %268 = vmatpush1.bf16.msra.mxu0 0
    %269 = vmatprep.subr.bf16.mxu0 0
    %270 = vmatpush1.bf16.msra.mxu0 0
    %271 = vmatprep.subr.bf16.mxu0 0
    %272 = vmatpush1.bf16.msra.mxu0 0
    %273 = vmatprep.subr.bf16.mxu0 0
    %274 = vmatpush1.bf16.msra.mxu0 0
    %275 = vmatprep.subr.bf16.mxu0 0
    %276 = vmatpush1.bf16.msra.mxu0 0
    %277 = vmatprep.subr.bf16.mxu0 0
    %278 = vmatpush1.bf16.msra.mxu0 0
    %279 = vmatprep.mubr.bf16.mxu0 0
    %280 = vmatmul.mubr.bf16.gmra.mrb[0].mxu0 %v175
    %v281 = vpop.f32.mrb[0].mxu0
    %v282 = vadd.f32 %v197, %v281
    %v283 = vpop.f32.mrb[0].mxu0
    %v284 = vpop.f32.mrb[0].mxu0
    %v285 = vadd.f32 %v197, %v284
    %v286 = vpop.f32.mrb[0].mxu0
    %287 = vdwg.mxu0
    %v288 = vmax.f32 %v282, 0.0
    %v289 = vmax.f32 %v285, 0.0
    %v290 = vpack.c.bf16 %v289, %v288
    %v291 = vld [vmem:[#allocation8] sm:$0xf]
    %v292 = vld [vmem:[#allocation8 + $0x4] sm:$0xf]
    %v293 = vld [vmem:[#allocation8 + $0x8] sm:$0xf]
    %v294 = vld [vmem:[#allocation8 + $0xc] sm:$0xf]
    %v295 = vld [vmem:[#allocation8 + $0x10] sm:$0xf]
    %v296 = vld [vmem:[#allocation8 + $0x14] sm:$0xf]
    %v297 = vld [vmem:[#allocation8 + $0x18] sm:$0xf]
    %v298 = vld [vmem:[#allocation8 + $0x1c] sm:$0xf]
    %v299 = vld [vmem:[#allocation8 + $0x20] sm:$0xf]
    %v300 = vld [vmem:[#allocation8 + $0x24] sm:$0xf]
    %v301 = vld [vmem:[#allocation8 + $0x28] sm:$0xf]
    %v302 = vld [vmem:[#allocation8 + $0x2c] sm:$0xf]
    %v303 = vld [vmem:[#allocation8 + $0x30] sm:$0xf]
    %v304 = vld [vmem:[#allocation8 + $0x34] sm:$0xf]
    %v305 = vld [vmem:[#allocation8 + $0x38] sm:$0xf]
    %v306 = vld [vmem:[#allocation8 + $0x3c] sm:$0xf]
    %v307 = vld [vmem:[%s6] sm:$0x1]
    %v309 = vlaneseq
    %v310 = vshrl.u32 %v309, 7
    %v311 = vsub.s32 0, %v310
    %v312 = vrot.slane %v307, %v311
    %v330 = vunpack.c.l.b16 %v291
    %v331 = vunpack.c.l.b16 %v292
    %v332 = vunpack.c.l.b16 %v293
    %v333 = vunpack.c.l.b16 %v294
    %v334 = vunpack.c.l.b16 %v295
    %v335 = vunpack.c.l.b16 %v296
    %v336 = vunpack.c.l.b16 %v297
    %v337 = vunpack.c.l.b16 %v298
    %v338 = vunpack.c.l.b16 %v299
    %v339 = vunpack.c.l.b16 %v300
    %v340 = vunpack.c.l.b16 %v301
    %v341 = vunpack.c.l.b16 %v302
    %v342 = vunpack.c.l.b16 %v303
    %v343 = vunpack.c.l.b16 %v304
    %v344 = vunpack.c.l.b16 %v305
    %v345 = vunpack.c.l.b16 %v306
    %v346 = vpack.c.b16 %v331, %v330
    %v347 = vpack.c.b16 %v333, %v332
    %v348 = vpack.c.b16 %v335, %v334
    %v349 = vpack.c.b16 %v337, %v336
    %v350 = vpack.c.b16 %v339, %v338
    %v351 = vpack.c.b16 %v341, %v340
    %v352 = vpack.c.b16 %v343, %v342
    %v353 = vpack.c.b16 %v345, %v344
    %362 = vmatprep.subr.bf16.mxu0 0
    %363 = vmatpush1.bf16.msra.mxu0 %v346
    %364 = vmatprep.subr.bf16.mxu0 0
    %365 = vmatpush1.bf16.msra.mxu0 %v347
    %366 = vmatprep.subr.bf16.mxu0 0
    %367 = vmatpush1.bf16.msra.mxu0 %v348
    %368 = vmatprep.subr.bf16.mxu0 0
    %369 = vmatpush1.bf16.msra.mxu0 %v349
    %370 = vmatprep.subr.bf16.mxu0 0
    %371 = vmatpush1.bf16.msra.mxu0 %v350
    %372 = vmatprep.subr.bf16.mxu0 0
    %373 = vmatpush1.bf16.msra.mxu0 %v351
    %374 = vmatprep.subr.bf16.mxu0 0
    %375 = vmatpush1.bf16.msra.mxu0 %v352
    %376 = vmatprep.subr.bf16.mxu0 0
    %377 = vmatpush1.bf16.msra.mxu0 %v353
    %378 = vmatprep.subr.bf16.mxu0 0
    %379 = vmatpush1.bf16.msra.mxu0 0
    %380 = vmatprep.subr.bf16.mxu0 0
    %381 = vmatpush1.bf16.msra.mxu0 0
    %382 = vmatprep.subr.bf16.mxu0 0
    %383 = vmatpush1.bf16.msra.mxu0 0
    %384 = vmatprep.subr.bf16.mxu0 0
    %385 = vmatpush1.bf16.msra.mxu0 0
    %386 = vmatprep.subr.bf16.mxu0 0
    %387 = vmatpush1.bf16.msra.mxu0 0
    %388 = vmatprep.subr.bf16.mxu0 0
    %389 = vmatpush1.bf16.msra.mxu0 0
    %390 = vmatprep.subr.bf16.mxu0 0
    %391 = vmatpush1.bf16.msra.mxu0 0
    %392 = vmatprep.subr.bf16.mxu0 0
    %393 = vmatpush1.bf16.msra.mxu0 0
    %394 = vmatprep.mubr.bf16.mxu0 0
    %395 = vmatmul.mubr.bf16.gmra.mrb[0].mxu0 %v290
    %v396 = vpop.f32.mrb[0].mxu0
    %v397 = vadd.f32 %v312, %v396
    %v398 = vpop.f32.mrb[0].mxu0
    %v399 = vpop.f32.mrb[0].mxu0
    %v400 = vadd.f32 %v312, %v399
    %v401 = vpop.f32.mrb[0].mxu0
    %402 = vdwg.mxu0
    %v403 = vmax.f32 %v397, 0.0
    %v404 = vmax.f32 %v400, 0.0
    %v405 = vpack.c.bf16 %v404, %v403
    %v406 = vld [vmem:[#allocation10] sm:$0xf]
    %v407 = vld [vmem:[#allocation10 + $0x4] sm:$0xf]
    %v408 = vld [vmem:[#allocation10 + $0x8] sm:$0xf]
    %v409 = vld [vmem:[#allocation10 + $0xc] sm:$0xf]
    %v410 = vld [vmem:[#allocation10 + $0x10] sm:$0xf]
    %v411 = vld [vmem:[#allocation10 + $0x14] sm:$0xf]
    %v412 = vld [vmem:[#allocation10 + $0x18] sm:$0xf]
    %v413 = vld [vmem:[#allocation10 + $0x1c] sm:$0xf]
    %v414 = vld [vmem:[#allocation10 + $0x20] sm:$0xf]
    %v415 = vld [vmem:[#allocation10 + $0x24] sm:$0xf]
    %v416 = vld [vmem:[#allocation10 + $0x28] sm:$0xf]
    %v417 = vld [vmem:[#allocation10 + $0x2c] sm:$0xf]
    %v418 = vld [vmem:[#allocation10 + $0x30] sm:$0xf]
    %v419 = vld [vmem:[#allocation10 + $0x34] sm:$0xf]
    %v420 = vld [vmem:[#allocation10 + $0x38] sm:$0xf]
    %v421 = vld [vmem:[#allocation10 + $0x3c] sm:$0xf]
    %v422 = vld [vmem:[%s8] sm:$0x1]
    %v424 = vlaneseq
    %v425 = vshrl.u32 %v424, 7
    %v426 = vsub.s32 0, %v425
    %v427 = vrot.slane %v422, %v426
    %v445 = vunpack.c.l.b16 %v406
    %v446 = vunpack.c.l.b16 %v407
    %v447 = vunpack.c.l.b16 %v408
    %v448 = vunpack.c.l.b16 %v409
    %v449 = vunpack.c.l.b16 %v410
    %v450 = vunpack.c.l.b16 %v411
    %v451 = vunpack.c.l.b16 %v412
    %v452 = vunpack.c.l.b16 %v413
    %v453 = vunpack.c.l.b16 %v414
    %v454 = vunpack.c.l.b16 %v415
    %v455 = vunpack.c.l.b16 %v416
    %v456 = vunpack.c.l.b16 %v417
    %v457 = vunpack.c.l.b16 %v418
    %v458 = vunpack.c.l.b16 %v419
    %v459 = vunpack.c.l.b16 %v420
    %v460 = vunpack.c.l.b16 %v421
    %v461 = vpack.c.b16 %v446, %v445
    %v462 = vpack.c.b16 %v448, %v447
    %v463 = vpack.c.b16 %v450, %v449
    %v464 = vpack.c.b16 %v452, %v451
    %v465 = vpack.c.b16 %v454, %v453
    %v466 = vpack.c.b16 %v456, %v455
    %v467 = vpack.c.b16 %v458, %v457
    %v468 = vpack.c.b16 %v460, %v459
    %477 = vmatprep.subr.bf16.mxu0 0
    %478 = vmatpush1.bf16.msra.mxu0 %v461
    %479 = vmatprep.subr.bf16.mxu0 0
    %480 = vmatpush1.bf16.msra.mxu0 %v462
    %481 = vmatprep.subr.bf16.mxu0 0
    %482 = vmatpush1.bf16.msra.mxu0 %v463
    %483 = vmatprep.subr.bf16.mxu0 0
    %484 = vmatpush1.bf16.msra.mxu0 %v464
    %485 = vmatprep.subr.bf16.mxu0 0
    %486 = vmatpush1.bf16.msra.mxu0 %v465
    %487 = vmatprep.subr.bf16.mxu0 0
    %488 = vmatpush1.bf16.msra.mxu0 %v466
    %489 = vmatprep.subr.bf16.mxu0 0
    %490 = vmatpush1.bf16.msra.mxu0 %v467
    %491 = vmatprep.subr.bf16.mxu0 0
    %492 = vmatpush1.bf16.msra.mxu0 %v468
    %493 = vmatprep.subr.bf16.mxu0 0
    %494 = vmatpush1.bf16.msra.mxu0 0
    %495 = vmatprep.subr.bf16.mxu0 0
    %496 = vmatpush1.bf16.msra.mxu0 0
    %497 = vmatprep.subr.bf16.mxu0 0
    %498 = vmatpush1.bf16.msra.mxu0 0
    %499 = vmatprep.subr.bf16.mxu0 0
    %500 = vmatpush1.bf16.msra.mxu0 0
    %501 = vmatprep.subr.bf16.mxu0 0
    %502 = vmatpush1.bf16.msra.mxu0 0
    %503 = vmatprep.subr.bf16.mxu0 0
    %504 = vmatpush1.bf16.msra.mxu0 0
    %505 = vmatprep.subr.bf16.mxu0 0
    %506 = vmatpush1.bf16.msra.mxu0 0
    %507 = vmatprep.subr.bf16.mxu0 0
    %508 = vmatpush1.bf16.msra.mxu0 0
    %509 = vmatprep.mubr.bf16.mxu0 0
    %510 = vmatmul.mubr.bf16.gmra.mrb[0].mxu0 %v405
    %v511 = vpop.f32.mrb[0].mxu0
    %v512 = vadd.f32 %v427, %v511
    %v513 = vpop.f32.mrb[0].mxu0
    %v514 = vpop.f32.mrb[0].mxu0
    %v515 = vadd.f32 %v427, %v514
    %v516 = vpop.f32.mrb[0].mxu0
    %517 = vdwg.mxu0
    %518 = vst [vmem:[#allocation11] sm:$0xff] %v512
    %519 = vst [vmem:[#allocation11 + $0x8] sm:$0xff] %v515
    // Predicated region
    $region58: #{tpu_custom_call.1} parent=1 // pred_check
      _
    $region59: #{tpu_custom_call.1} parent=1 // pred_check_branch
      %521 = sbr.rel (0) target = $region61
    $region60: #{tpu_custom_call.1} parent=1 // pred_region
      %s523 = ssub.s32 256, 256
      %524 = vsyncadd [#allocation4], %s523
      %s525 = sshll.u32 [#allocation11], 4
      %s526 = int_to_ptr.vmem [resolvable:$true] %s525
      %531 = dma.vmem_to_hbm [thread:$0]  %s526, 256, %s9, [#allocation4], 128, 128, 8
    $region61: #{tpu_custom_call.1} parent=1 // pred_fallthru
      _
    // Predicated region
    $region62: #{tpu_custom_call.1} parent=1 // pred_check
      _
    $region63: #{tpu_custom_call.1} parent=1 // pred_check_branch
      %533 = sbr.rel (0) target = $region65
    $region64: #{tpu_custom_call.1} parent=1 // pred_region
      %534 = dma.done [#allocation4], 256
    $region65: #{tpu_custom_call.1} parent=1 // pred_fallthru
      _
    %535 = vsyncpa [#allocation3], 1
    %536 = vsyncpa [#allocation6], 1
    %537 = vsyncpa [#allocation9], 1
    %538 = vsyncpa [#allocation4], 1

</llo_original>
